<compile_context>
chip_gen: v7x
topology: tpu7x:2x2x1
jax: 0.10.0
libtpu: 0.0.40
codegen_flags: <defaults>
</compile_context>

<pallas_src>
import jax
import jax.numpy as jnp
from jax import lax
from jax.experimental import pallas as pl
from jax.experimental.pallas import tpu as pltpu


def _round_up(x: int, m: int) -> int:
    return (x + m - 1) // m * m


def _make_pool_kernel(tb: int, seq_len: int, vocab_p: int, hidden_p: int,
                      pooling_style: str):
    """One grid step pools `tb` batch rows at once with a single MXU matmul."""

    def kernel(ids_ref, emb_ref, out_ref):
        # ids_ref : (tb, seq_len) int32   token ids for this batch tile (VMEM)
        # emb_ref : (vocab_p, hidden_p) f32 embedding table (VMEM resident)
        # out_ref : (tb, hidden_p) f32    pooled output tile
        ids = ids_ref[...]                                   # (tb, S)
        table = emb_ref[...].astype(jnp.float32)             # (Vp, Hp)
        vocab_iota = lax.broadcasted_iota(jnp.int32, (tb, vocab_p), 1)

        if pooling_style == "max":
            # Batched gather: one (S*tb, Vp) one-hot, ONE MXU matmul, then the
            # max over S as cheap VPU maximums on sublane-aligned slices.
            onehots = [
                (ids[:, t:t + 1] == vocab_iota).astype(jnp.float32)
                for t in range(seq_len)
            ]
            onehot_all = jnp.concatenate(onehots, axis=0)          # (S*tb, Vp)
            rows = jnp.dot(onehot_all, table,
                           preferred_element_type=jnp.float32)     # (S*tb, Hp)
            acc = rows[0:tb, :]
            for t in range(1, seq_len):
                acc = jnp.maximum(acc, rows[t * tb:(t + 1) * tb, :])
            out_ref[...] = acc
        else:
            # Avg pooling: token counts on the VPU (S one-hot adds that
            # co-issue for free), then ONE matmul and a 1/S scale.
            counts = jnp.zeros((tb, vocab_p), dtype=jnp.float32)
            for t in range(seq_len):
                counts = counts + (ids[:, t:t + 1] == vocab_iota).astype(jnp.float32)
            pooled = jnp.dot(counts, table,
                             preferred_element_type=jnp.float32)   # (tb, Hp)
            out_ref[...] = pooled * (1.0 / seq_len)

    return kernel


def sentence_encoder_forward(ids, emb_table, pooling_style="max", tb=None):
    """ids: (B, S) int; emb_table: (V+1, H) f32 -> (B, H) f32 pooled output."""
    B, S = ids.shape
    V1, H = emb_table.shape

    # Whole padded batch per grid step for small B (single step here);
    # cap at 512 rows/step for large batches.
    if tb is None:
        tb = min(_round_up(B, 8), 512)
    assert tb % 8 == 0, "batch tile must be a sublane multiple"

    B_pad = _round_up(max(B, tb), tb)
    V_pad = _round_up(V1, 128)   # lane-align the one-hot / matmul-K dimension
    H_pad = _round_up(H, 128)    # lane-dense (unmasked) output stores

    ids_p = jnp.zeros((B_pad, S), jnp.int32).at[:B, :].set(ids.astype(jnp.int32))
    emb_p = jnp.zeros((V_pad, H_pad), jnp.float32).at[:V1, :H].set(
        emb_table.astype(jnp.float32))

    kernel = _make_pool_kernel(tb, S, V_pad, H_pad, pooling_style)

    grid_spec = pltpu.PrefetchScalarGridSpec(
        num_scalar_prefetch=0,
        grid=(B_pad // tb,),
        in_specs=[
            # Per-tile slab of token ids.
            pl.BlockSpec((tb, S), lambda i: (i, 0)),
            # Constant block index -> DMA'd once, reused for every grid step.
            # TODO(synk): for realistic vocab sizes use memory_space=pl.ANY +
            # per-row DMA gather instead (v7x 64 MiB VMEM), and single-buffer
            # the resident copy (pipeline_mode=pl.Buffered(1)).
            pl.BlockSpec((V_pad, H_pad), lambda i: (0, 0)),
        ],
        out_specs=pl.BlockSpec((tb, H_pad), lambda i: (i, 0)),
    )

    # Explicit VMEM budget: double-buffered windows + generous headroom for
    # kernel temporaries (one-hot / matmul result tiles).
    tbl_b = V_pad * H_pad * 4
    ids_b = tb * S * 4
    out_b = tb * H_pad * 4
    vmem_limit = min(2 * (tbl_b + ids_b + out_b) + (8 << 20), 128 << 20)

    out = pl.pallas_call(
        kernel,
        out_shape=jax.ShapeDtypeStruct((B_pad, H_pad), jnp.float32),
        grid_spec=grid_spec,
        compiler_params=pltpu.CompilerParams(
            # Batch tiles are independent -> shard across TensorCores on v7x
            # once the batch grid has multiple steps (neutral at 1 step).
            dimension_semantics=("parallel",),
            vmem_limit_bytes=vmem_limit,
        ),
    )(ids_p, emb_p)

    return out[:B, :H]


if __name__ == "__main__":
    # Small config consistent with the module: vocab_size=30 (+1 padding row),
    # hidden_size=128, max_length(seq)=8, batch=12.
    key = jax.random.PRNGKey(0)
    k_emb, k_ids = jax.random.split(key)

    VOCAB = 30
    HIDDEN = 128
    SEQ = 8
    BATCH = 12

    # nn.Embedding(vocab_size + 1, hidden, padding_idx=0): row 0 zeroed.
    emb_table = jax.random.normal(k_emb, (VOCAB + 1, HIDDEN), dtype=jnp.float32)
    emb_table = emb_table.at[0].set(0.0)

    # Token ids in [0, VOCAB], with a padded tail of zeros.
    ids = jax.random.randint(k_ids, (BATCH, SEQ), 0, VOCAB + 1, dtype=jnp.int32)
    ids = ids.at[:, -2:].set(0)

    # Check both pooling styles against the pure-JAX reference of the PyTorch
    # forward (embedding -> pool over seq -> squeeze).
    for pooling in ("max", "avg"):
        out = sentence_encoder_forward(ids, emb_table, pooling_style=pooling)
        out = jax.block_until_ready(out)

        gathered = emb_table[ids]                      # (B, S, H)
        if pooling == "max":
            ref = jnp.max(gathered, axis=1)
        else:
            ref = jnp.mean(gathered, axis=1)

        assert out.shape == (BATCH, HIDDEN)
        assert jnp.allclose(out, ref, atol=1e-5, rtol=1e-5), f"mismatch ({pooling})"

    print("KERNEL_OK")
</pallas_src>

<mosaic_0001>
module attributes {stable_mosaic.version = 11 : i64} {
  func.func @kernel(%arg0: i32, %arg1: memref<16x8xi32, #tpu.memory_space<vmem>>, %arg2: memref<128x128xf32, #tpu.memory_space<vmem>>, %arg3: memref<16x128xf32, #tpu.memory_space<vmem>>) attributes {dimension_semantics = [#tpu.dimension_semantics<parallel>], iteration_bounds = array<i64: 1>, scalar_prefetch = 0 : i64, scratch_operands = 0 : i64, tpu.core_type = #tpu.core_type<tc>, window_params = [{transform_indices = @transform_0, window_bounds = array<i64: 16, 8>}, {pipeline_mode = #tpu.pipeline_mode<synchronous>, transform_indices = @transform_1, window_bounds = array<i64: 128, 128>}, {transform_indices = @transform_2, window_bounds = array<i64: 16, 128>}]} {
    %c0 = arith.constant 0 : index
    %c0_0 = arith.constant 0 : index
    %0 = vector.load %arg1[%c0, %c0_0] : memref<16x8xi32, #tpu.memory_space<vmem>>, vector<16x8xi32>
    %c0_1 = arith.constant 0 : index
    %c0_2 = arith.constant 0 : index
    %1 = vector.load %arg2[%c0_1, %c0_2] : memref<128x128xf32, #tpu.memory_space<vmem>>, vector<128x128xf32>
    %2 = tpu.iota {dimensions = array<i32: 1>} : vector<16x128xi32>
    %3 = vector.extract_strided_slice %0 {offsets = [0, 0], sizes = [16, 1], strides = [1, 1]} : vector<16x8xi32> to vector<16x1xi32>
    %4 = vector.broadcast %3 : vector<16x1xi32> to vector<16x128xi32>
    %5 = arith.cmpi eq, %4, %2 : vector<16x128xi32>
    %6 = arith.extui %5 : vector<16x128xi1> to vector<16x128xi32>
    %7 = arith.sitofp %6 : vector<16x128xi32> to vector<16x128xf32>
    %8 = vector.extract_strided_slice %0 {offsets = [0, 1], sizes = [16, 1], strides = [1, 1]} : vector<16x8xi32> to vector<16x1xi32>
    %9 = vector.broadcast %8 : vector<16x1xi32> to vector<16x128xi32>
    %10 = arith.cmpi eq, %9, %2 : vector<16x128xi32>
    %11 = arith.extui %10 : vector<16x128xi1> to vector<16x128xi32>
    %12 = arith.sitofp %11 : vector<16x128xi32> to vector<16x128xf32>
    %13 = vector.extract_strided_slice %0 {offsets = [0, 2], sizes = [16, 1], strides = [1, 1]} : vector<16x8xi32> to vector<16x1xi32>
    %14 = vector.broadcast %13 : vector<16x1xi32> to vector<16x128xi32>
    %15 = arith.cmpi eq, %14, %2 : vector<16x128xi32>
    %16 = arith.extui %15 : vector<16x128xi1> to vector<16x128xi32>
    %17 = arith.sitofp %16 : vector<16x128xi32> to vector<16x128xf32>
    %18 = vector.extract_strided_slice %0 {offsets = [0, 3], sizes = [16, 1], strides = [1, 1]} : vector<16x8xi32> to vector<16x1xi32>
    %19 = vector.broadcast %18 : vector<16x1xi32> to vector<16x128xi32>
    %20 = arith.cmpi eq, %19, %2 : vector<16x128xi32>
    %21 = arith.extui %20 : vector<16x128xi1> to vector<16x128xi32>
    %22 = arith.sitofp %21 : vector<16x128xi32> to vector<16x128xf32>
    %23 = vector.extract_strided_slice %0 {offsets = [0, 4], sizes = [16, 1], strides = [1, 1]} : vector<16x8xi32> to vector<16x1xi32>
    %24 = vector.broadcast %23 : vector<16x1xi32> to vector<16x128xi32>
    %25 = arith.cmpi eq, %24, %2 : vector<16x128xi32>
    %26 = arith.extui %25 : vector<16x128xi1> to vector<16x128xi32>
    %27 = arith.sitofp %26 : vector<16x128xi32> to vector<16x128xf32>
    %28 = vector.extract_strided_slice %0 {offsets = [0, 5], sizes = [16, 1], strides = [1, 1]} : vector<16x8xi32> to vector<16x1xi32>
    %29 = vector.broadcast %28 : vector<16x1xi32> to vector<16x128xi32>
    %30 = arith.cmpi eq, %29, %2 : vector<16x128xi32>
    %31 = arith.extui %30 : vector<16x128xi1> to vector<16x128xi32>
    %32 = arith.sitofp %31 : vector<16x128xi32> to vector<16x128xf32>
    %33 = vector.extract_strided_slice %0 {offsets = [0, 6], sizes = [16, 1], strides = [1, 1]} : vector<16x8xi32> to vector<16x1xi32>
    %34 = vector.broadcast %33 : vector<16x1xi32> to vector<16x128xi32>
    %35 = arith.cmpi eq, %34, %2 : vector<16x128xi32>
    %36 = arith.extui %35 : vector<16x128xi1> to vector<16x128xi32>
    %37 = arith.sitofp %36 : vector<16x128xi32> to vector<16x128xf32>
    %38 = vector.extract_strided_slice %0 {offsets = [0, 7], sizes = [16, 1], strides = [1, 1]} : vector<16x8xi32> to vector<16x1xi32>
    %39 = vector.broadcast %38 : vector<16x1xi32> to vector<16x128xi32>
    %40 = arith.cmpi eq, %39, %2 : vector<16x128xi32>
    %41 = arith.extui %40 : vector<16x128xi1> to vector<16x128xi32>
    %42 = arith.sitofp %41 : vector<16x128xi32> to vector<16x128xf32>
    %43 = tpu.concatenate %7, %12, %17, %22, %27, %32, %37, %42 in 0 : vector<16x128xf32>, vector<16x128xf32>, vector<16x128xf32>, vector<16x128xf32>, vector<16x128xf32>, vector<16x128xf32>, vector<16x128xf32>, vector<16x128xf32> -> vector<128x128xf32>
    %cst = arith.constant dense<0.000000e+00> : vector<128x128xf32>
    %44 = tpu.matmul %43, %1, %cst {dimension_numbers = #tpu.dot_dimension_numbers<[1], [0], [0], [1], [0, 0, 1, 1], [], []>} : vector<128x128xf32>, vector<128x128xf32>, vector<128x128xf32> -> vector<128x128xf32>
    %45 = vector.extract_strided_slice %44 {offsets = [0, 0], sizes = [16, 128], strides = [1, 1]} : vector<128x128xf32> to vector<16x128xf32>
    %46 = vector.extract_strided_slice %44 {offsets = [16, 0], sizes = [16, 128], strides = [1, 1]} : vector<128x128xf32> to vector<16x128xf32>
    %47 = arith.maximumf %45, %46 : vector<16x128xf32>
    %48 = vector.extract_strided_slice %44 {offsets = [32, 0], sizes = [16, 128], strides = [1, 1]} : vector<128x128xf32> to vector<16x128xf32>
    %49 = arith.maximumf %47, %48 : vector<16x128xf32>
    %50 = vector.extract_strided_slice %44 {offsets = [48, 0], sizes = [16, 128], strides = [1, 1]} : vector<128x128xf32> to vector<16x128xf32>
    %51 = arith.maximumf %49, %50 : vector<16x128xf32>
    %52 = vector.extract_strided_slice %44 {offsets = [64, 0], sizes = [16, 128], strides = [1, 1]} : vector<128x128xf32> to vector<16x128xf32>
    %53 = arith.maximumf %51, %52 : vector<16x128xf32>
    %54 = vector.extract_strided_slice %44 {offsets = [80, 0], sizes = [16, 128], strides = [1, 1]} : vector<128x128xf32> to vector<16x128xf32>
    %55 = arith.maximumf %53, %54 : vector<16x128xf32>
    %56 = vector.extract_strided_slice %44 {offsets = [96, 0], sizes = [16, 128], strides = [1, 1]} : vector<128x128xf32> to vector<16x128xf32>
    %57 = arith.maximumf %55, %56 : vector<16x128xf32>
    %58 = vector.extract_strided_slice %44 {offsets = [112, 0], sizes = [16, 128], strides = [1, 1]} : vector<128x128xf32> to vector<16x128xf32>
    %59 = arith.maximumf %57, %58 : vector<16x128xf32>
    %c0_3 = arith.constant 0 : index
    %c0_4 = arith.constant 0 : index
    %60 = vector.load %arg3[%c0_3, %c0_4] : memref<16x128xf32, #tpu.memory_space<vmem>>, vector<16x128xf32>
    tpu.vector_store %arg3[%c0_3, %c0_4], %59 {strides = array<i32>} : memref<16x128xf32, #tpu.memory_space<vmem>>, vector<16x128xf32>,
    return
  }
  func.func @transform_0(%arg0: i32) -> (i32, i32) {
    %c0_i32 = arith.constant 0 : i32
    %c0_i32_0 = arith.constant 0 : i32
    return %arg0, %c0_i32 : i32, i32
  }
  func.func @transform_1(%arg0: i32) -> (i32, i32) {
    %c0_i32 = arith.constant 0 : i32
    %c0_i32_0 = arith.constant 0 : i32
    %c0_i32_1 = arith.constant 0 : i32
    return %c0_i32, %c0_i32_0 : i32, i32
  }
  func.func @transform_2(%arg0: i32) -> (i32, i32) {
    %c0_i32 = arith.constant 0 : i32
    %c0_i32_0 = arith.constant 0 : i32
    return %arg0, %c0_i32 : i32, i32
  }
}

</mosaic_0001>

<llo_original>
// kernel: tpu_custom_call.1
$region0: #{tpu_custom_call.1}
  #allocation0 [shape = 'u32[]', space=smem, size = 0x4, offset = 0x4, fixed_abs, tag = 'smem constant byte address 0x4 - core index']
  #allocation1 [shape = 'u32[144,128]{1,0:T(1,128)}', space=vmem, size = 0x12000, scoped, tag = 'internal scratch']
  %s0 = inlined_call_operand.vmem [shape: s32[16,8], index: 0, kind: input, shape index: {}]
  %s1 = inlined_call_operand.hbm [shape: f32[128,128], index: 1, kind: input, shape index: {}]
  %s2 = inlined_call_operand.hbm [shape: f32[16,128], index: 2, kind: output, shape index: {}]
  %s3 = sld [smem:[#allocation0]]
  $region22: #{tpu_custom_call.1} parent=0
    _
  %s5 = ssub.s32 1, %s3
  %s6 = scalar_select 0, %s5, %s3
  $region1: #{tpu_custom_call.1} parent=0
    #allocation2 [shape = 'u8[65536]{0}', space=vmem, size = 0x10000, scoped, tag = 'input window, operand 1, single buffered']
    #allocation3 [shape = 's32[1]{0}', space=sflag, size = 0x4, scoped, tag = 'scoped memory for tpu_custom_call.1']
    #allocation4 [shape = 's32[1]{0}', space=sflag, size = 0x4, scoped, tag = 'scoped memory for tpu_custom_call.1']
    #allocation5 [shape = 'u8[8192]{0}', space=vmem, size = 0x2000, scoped, tag = 'output window, operand 0, single buffered']
    %7 = vsyncpa [#allocation3], 0
    %8 = vsyncpa [#allocation4], 0
    // Predicated region
    $region2: #{tpu_custom_call.1} parent=1 // pred_check
      _
    $region3: #{tpu_custom_call.1} parent=1 // pred_check_branch
      %10 = sbr.rel (0) target = $region5
    $region4: #{tpu_custom_call.1} parent=1 // pred_region
      _
    $region5: #{tpu_custom_call.1} parent=1 // pred_fallthru
      _
    // Predicated region
    $region6: #{tpu_custom_call.1} parent=1 // pred_check
      _
    $region7: #{tpu_custom_call.1} parent=1 // pred_check_branch
      %12 = sbr.rel (0) target = $region9
    $region8: #{tpu_custom_call.1} parent=1 // pred_region
      %s14 = ssub.s32 2048, 2048
      %15 = vsyncadd [#allocation3], %s14
      %s16 = sshll.u32 [#allocation2], 4
      %s17 = int_to_ptr.vmem [resolvable:$true] %s16
      %22 = dma.hbm_to_vmem [thread:$0]  %s1, 2048, %s17, [#allocation3], 128, 128, 8
    $region9: #{tpu_custom_call.1} parent=1 // pred_fallthru
      _
    // Predicated region
    $region10: #{tpu_custom_call.1} parent=1 // pred_check
      _
    $region11: #{tpu_custom_call.1} parent=1 // pred_check_branch
      %24 = sbr.rel (0) target = $region13
    $region12: #{tpu_custom_call.1} parent=1 // pred_region
      %25 = dma.done [#allocation3], 2048
    $region13: #{tpu_custom_call.1} parent=1 // pred_fallthru
      _
    %v26 = vld [vmem:[%s0] sm:$0xff]
    %v27 = vld [vmem:[%s0 + $0x8] sm:$0xff]
    %v28 = vld [vmem:[#allocation2] sm:$0xff]
    %v29 = vld [vmem:[#allocation2 + $0x8] sm:$0xff]
    %v30 = vld [vmem:[#allocation2 + $0x10] sm:$0xff]
    %v31 = vld [vmem:[#allocation2 + $0x18] sm:$0xff]
    %v32 = vld [vmem:[#allocation2 + $0x20] sm:$0xff]
    %v33 = vld [vmem:[#allocation2 + $0x28] sm:$0xff]
    %v34 = vld [vmem:[#allocation2 + $0x30] sm:$0xff]
    %v35 = vld [vmem:[#allocation2 + $0x38] sm:$0xff]
    %v36 = vld [vmem:[#allocation2 + $0x40] sm:$0xff]
    %v37 = vld [vmem:[#allocation2 + $0x48] sm:$0xff]
    %v38 = vld [vmem:[#allocation2 + $0x50] sm:$0xff]
    %v39 = vld [vmem:[#allocation2 + $0x58] sm:$0xff]
    %v40 = vld [vmem:[#allocation2 + $0x60] sm:$0xff]
    %v41 = vld [vmem:[#allocation2 + $0x68] sm:$0xff]
    %v42 = vld [vmem:[#allocation2 + $0x70] sm:$0xff]
    %v43 = vld [vmem:[#allocation2 + $0x78] sm:$0xff]
    %v44 = vlaneseq
    %v45 = vand.u32 %v44, 127
    %46 = vset.pattern.permute.xlu0 0
    %47 = vperm.xlu0 %46, %v26
    %v48 = vpop.permute.xlu0 %47
    %49 = vset.pattern.permute.xlu0 0
    %50 = vperm.xlu0 %49, %v27
    %v51 = vpop.permute.xlu0 %50
    %vm52 = vcmp.eq.s32.totalorder %v48, %v45
    %vm53 = vcmp.eq.s32.totalorder %v51, %v45
    %v54 = vsel %vm52, 1, 0
    %v55 = vsel %vm53, 1, 0
    %v56 = vcvt.s32.f32 %v54
    %v57 = vcvt.s32.f32 %v55
    %58 = vset.pattern.permute.xlu0 1
    %59 = vperm.xlu0 %58, %v26
    %v60 = vpop.permute.xlu0 %59
    %61 = vset.pattern.permute.xlu0 1
    %62 = vperm.xlu0 %61, %v27
    %v63 = vpop.permute.xlu0 %62
    %vm64 = vcmp.eq.s32.totalorder %v60, %v45
    %vm65 = vcmp.eq.s32.totalorder %v63, %v45
    %v66 = vsel %vm64, 1, 0
    %v67 = vsel %vm65, 1, 0
    %v68 = vcvt.s32.f32 %v66
    %v69 = vcvt.s32.f32 %v67
    %70 = vset.pattern.permute.xlu0 2
    %71 = vperm.xlu0 %70, %v26
    %v72 = vpop.permute.xlu0 %71
    %73 = vset.pattern.permute.xlu0 2
    %74 = vperm.xlu0 %73, %v27
    %v75 = vpop.permute.xlu0 %74
    %vm76 = vcmp.eq.s32.totalorder %v72, %v45
    %vm77 = vcmp.eq.s32.totalorder %v75, %v45
    %v78 = vsel %vm76, 1, 0
    %v79 = vsel %vm77, 1, 0
    %v80 = vcvt.s32.f32 %v78
    %v81 = vcvt.s32.f32 %v79
    %82 = vset.pattern.permute.xlu0 3
    %83 = vperm.xlu0 %82, %v26
    %v84 = vpop.permute.xlu0 %83
    %85 = vset.pattern.permute.xlu0 3
    %86 = vperm.xlu0 %85, %v27
    %v87 = vpop.permute.xlu0 %86
    %vm88 = vcmp.eq.s32.totalorder %v84, %v45
    %vm89 = vcmp.eq.s32.totalorder %v87, %v45
    %v90 = vsel %vm88, 1, 0
    %v91 = vsel %vm89, 1, 0
    %v92 = vcvt.s32.f32 %v90
    %v93 = vcvt.s32.f32 %v91
    %94 = vset.pattern.permute.xlu0 4
    %95 = vperm.xlu0 %94, %v26
    %v96 = vpop.permute.xlu0 %95
    %97 = vset.pattern.permute.xlu0 4
    %98 = vperm.xlu0 %97, %v27
    %v99 = vpop.permute.xlu0 %98
    %vm100 = vcmp.eq.s32.totalorder %v96, %v45
    %vm101 = vcmp.eq.s32.totalorder %v99, %v45
    %v102 = vsel %vm100, 1, 0
    %v103 = vsel %vm101, 1, 0
    %v104 = vcvt.s32.f32 %v102
    %v105 = vcvt.s32.f32 %v103
    %106 = vset.pattern.permute.xlu0 5
    %107 = vperm.xlu0 %106, %v26
    %v108 = vpop.permute.xlu0 %107
    %109 = vset.pattern.permute.xlu0 5
    %110 = vperm.xlu0 %109, %v27
    %v111 = vpop.permute.xlu0 %110
    %vm112 = vcmp.eq.s32.totalorder %v108, %v45
    %vm113 = vcmp.eq.s32.totalorder %v111, %v45
    %v114 = vsel %vm112, 1, 0
    %v115 = vsel %vm113, 1, 0
    %v116 = vcvt.s32.f32 %v114
    %v117 = vcvt.s32.f32 %v115
    %118 = vset.pattern.permute.xlu0 6
    %119 = vperm.xlu0 %118, %v26
    %v120 = vpop.permute.xlu0 %119
    %121 = vset.pattern.permute.xlu0 6
    %122 = vperm.xlu0 %121, %v27
    %v123 = vpop.permute.xlu0 %122
    %vm124 = vcmp.eq.s32.totalorder %v120, %v45
    %vm125 = vcmp.eq.s32.totalorder %v123, %v45
    %v126 = vsel %vm124, 1, 0
    %v127 = vsel %vm125, 1, 0
    %v128 = vcvt.s32.f32 %v126
    %v129 = vcvt.s32.f32 %v127
    %130 = vset.pattern.permute.xlu0 7
    %131 = vperm.xlu0 %130, %v26
    %v132 = vpop.permute.xlu0 %131
    %133 = vset.pattern.permute.xlu0 7
    %134 = vperm.xlu0 %133, %v27
    %v135 = vpop.permute.xlu0 %134
    %vm136 = vcmp.eq.s32.totalorder %v132, %v45
    %vm137 = vcmp.eq.s32.totalorder %v135, %v45
    %v138 = vsel %vm136, 1, 0
    %v139 = vsel %vm137, 1, 0
    %v140 = vcvt.s32.f32 %v138
    %v141 = vcvt.s32.f32 %v139
    %142 = vmatprep.subr.mxu0 0.0
    %143 = vmatpush1.msra.mxu0 %v28
    %144 = vmatprep.subr.mxu0 0.0
    %145 = vmatpush1.msra.mxu0 %v29
    %146 = vmatprep.subr.mxu0 0.0
    %147 = vmatpush1.msra.mxu0 %v30
    %148 = vmatprep.subr.mxu0 0.0
    %149 = vmatpush1.msra.mxu0 %v31
    %150 = vmatprep.subr.mxu0 0.0
    %151 = vmatpush1.msra.mxu0 %v32
    %152 = vmatprep.subr.mxu0 0.0
    %153 = vmatpush1.msra.mxu0 %v33
    %154 = vmatprep.subr.mxu0 0.0
    %155 = vmatpush1.msra.mxu0 %v34
    %156 = vmatprep.subr.mxu0 0.0
    %157 = vmatpush1.msra.mxu0 %v35
    %158 = vmatprep.subr.mxu0 0.0
    %159 = vmatpush1.msra.mxu0 %v36
    %160 = vmatprep.subr.mxu0 0.0
    %161 = vmatpush1.msra.mxu0 %v37
    %162 = vmatprep.subr.mxu0 0.0
    %163 = vmatpush1.msra.mxu0 %v38
    %164 = vmatprep.subr.mxu0 0.0
    %165 = vmatpush1.msra.mxu0 %v39
    %166 = vmatprep.subr.mxu0 0.0
    %167 = vmatpush1.msra.mxu0 %v40
    %168 = vmatprep.subr.mxu0 0.0
    %169 = vmatpush1.msra.mxu0 %v41
    %170 = vmatprep.subr.mxu0 0.0
    %171 = vmatpush1.msra.mxu0 %v42
    %172 = vmatprep.subr.mxu0 0.0
    %173 = vmatpush1.msra.mxu0 %v43
    %174 = vmatprep.subr.mxu0 0.0
    %175 = vmatpush1.msra.mxu0 0.0
    %176 = vmatprep.subr.mxu0 0.0
    %177 = vmatpush1.msra.mxu0 0.0
    %178 = vmatprep.subr.mxu0 0.0
    %179 = vmatpush1.msra.mxu0 0.0
    %180 = vmatprep.subr.mxu0 0.0
    %181 = vmatpush1.msra.mxu0 0.0
    %182 = vmatprep.subr.mxu0 0.0
    %183 = vmatpush1.msra.mxu0 0.0
    %184 = vmatprep.subr.mxu0 0.0
    %185 = vmatpush1.msra.mxu0 0.0
    %186 = vmatprep.subr.mxu0 0.0
    %187 = vmatpush1.msra.mxu0 0.0
    %188 = vmatprep.subr.mxu0 0.0
    %189 = vmatpush1.msra.mxu0 0.0
    %190 = vmatprep.subr.mxu0 0.0
    %191 = vmatpush1.msra.mxu0 0.0
    %192 = vmatprep.subr.mxu0 0.0
    %193 = vmatpush1.msra.mxu0 0.0
    %194 = vmatprep.subr.mxu0 0.0
    %195 = vmatpush1.msra.mxu0 0.0
    %196 = vmatprep.subr.mxu0 0.0
    %197 = vmatpush1.msra.mxu0 0.0
    %198 = vmatprep.subr.mxu0 0.0
    %199 = vmatpush1.msra.mxu0 0.0
    %200 = vmatprep.subr.mxu0 0.0
    %201 = vmatpush1.msra.mxu0 0.0
    %202 = vmatprep.subr.mxu0 0.0
    %203 = vmatpush1.msra.mxu0 0.0
    %204 = vmatprep.subr.mxu0 0.0
    %205 = vmatpush1.msra.mxu0 0.0
    %206 = vmatprep.mubr.f32.mxu0 0.0
    %207 = vmatmul.mubr.f32.gmra.mrb[0].mxu0 %v56
    %v208 = vpop.f32.mrb[0].mxu0
    %v209 = vadd.f32 0.0, %v208
    %v210 = vpop.f32.mrb[0].mxu0
    %211 = vmatprep.mubr.f32.mxu0 0.0
    %212 = vmatmul.mubr.f32.gmra.mrb[0].mxu0 %v57
    %v213 = vpop.f32.mrb[0].mxu0
    %v214 = vadd.f32 0.0, %v213
    %v215 = vpop.f32.mrb[0].mxu0
    %216 = vmatprep.mubr.f32.mxu0 0.0
    %217 = vmatmul.mubr.f32.gmra.mrb[0].mxu0 %v68
    %v218 = vpop.f32.mrb[0].mxu0
    %v219 = vadd.f32 0.0, %v218
    %v220 = vpop.f32.mrb[0].mxu0
    %221 = vmatprep.mubr.f32.mxu0 0.0
    %222 = vmatmul.mubr.f32.gmra.mrb[0].mxu0 %v69
    %v223 = vpop.f32.mrb[0].mxu0
    %v224 = vadd.f32 0.0, %v223
    %v225 = vpop.f32.mrb[0].mxu0
    %226 = vmatprep.mubr.f32.mxu0 0.0
    %227 = vmatmul.mubr.f32.gmra.mrb[0].mxu0 %v80
    %v228 = vpop.f32.mrb[0].mxu0
    %v229 = vadd.f32 0.0, %v228
    %v230 = vpop.f32.mrb[0].mxu0
    %231 = vmatprep.mubr.f32.mxu0 0.0
    %232 = vmatmul.mubr.f32.gmra.mrb[0].mxu0 %v81
    %v233 = vpop.f32.mrb[0].mxu0
    %v234 = vadd.f32 0.0, %v233
    %v235 = vpop.f32.mrb[0].mxu0
    %236 = vmatprep.mubr.f32.mxu0 0.0
    %237 = vmatmul.mubr.f32.gmra.mrb[0].mxu0 %v92
    %v238 = vpop.f32.mrb[0].mxu0
    %v239 = vadd.f32 0.0, %v238
    %v240 = vpop.f32.mrb[0].mxu0
    %241 = vmatprep.mubr.f32.mxu0 0.0
    %242 = vmatmul.mubr.f32.gmra.mrb[0].mxu0 %v93
    %v243 = vpop.f32.mrb[0].mxu0
    %v244 = vadd.f32 0.0, %v243
    %v245 = vpop.f32.mrb[0].mxu0
    %246 = vmatprep.mubr.f32.mxu0 0.0
    %247 = vmatmul.mubr.f32.gmra.mrb[0].mxu0 %v104
    %v248 = vpop.f32.mrb[0].mxu0
    %v249 = vadd.f32 0.0, %v248
    %v250 = vpop.f32.mrb[0].mxu0
    %251 = vmatprep.mubr.f32.mxu0 0.0
    %252 = vmatmul.mubr.f32.gmra.mrb[0].mxu0 %v105
    %v253 = vpop.f32.mrb[0].mxu0
    %v254 = vadd.f32 0.0, %v253
    %v255 = vpop.f32.mrb[0].mxu0
    %256 = vmatprep.mubr.f32.mxu0 0.0
    %257 = vmatmul.mubr.f32.gmra.mrb[0].mxu0 %v116
    %v258 = vpop.f32.mrb[0].mxu0
    %v259 = vadd.f32 0.0, %v258
    %v260 = vpop.f32.mrb[0].mxu0
    %261 = vmatprep.mubr.f32.mxu0 0.0
    %262 = vmatmul.mubr.f32.gmra.mrb[0].mxu0 %v117
    %v263 = vpop.f32.mrb[0].mxu0
    %v264 = vadd.f32 0.0, %v263
    %v265 = vpop.f32.mrb[0].mxu0
    %266 = vmatprep.mubr.f32.mxu0 0.0
    %267 = vmatmul.mubr.f32.gmra.mrb[0].mxu0 %v128
    %v268 = vpop.f32.mrb[0].mxu0
    %v269 = vadd.f32 0.0, %v268
    %v270 = vpop.f32.mrb[0].mxu0
    %271 = vmatprep.mubr.f32.mxu0 0.0
    %272 = vmatmul.mubr.f32.gmra.mrb[0].mxu0 %v129
    %v273 = vpop.f32.mrb[0].mxu0
    %v274 = vadd.f32 0.0, %v273
    %v275 = vpop.f32.mrb[0].mxu0
    %276 = vmatprep.mubr.f32.mxu0 0.0
    %277 = vmatmul.mubr.f32.gmra.mrb[0].mxu0 %v140
    %v278 = vpop.f32.mrb[0].mxu0
    %v279 = vadd.f32 0.0, %v278
    %v280 = vpop.f32.mrb[0].mxu0
    %281 = vmatprep.mubr.f32.mxu0 0.0
    %282 = vmatmul.mubr.f32.gmra.mrb[0].mxu0 %v141
    %v283 = vpop.f32.mrb[0].mxu0
    %v284 = vadd.f32 0.0, %v283
    %v285 = vpop.f32.mrb[0].mxu0
    %286 = vdwg.mxu0
    %v287 = vmax.f32 %v209, %v219
    %v288 = vmax.f32 %v214, %v224
    %v289 = vmax.f32 %v287, %v229
    %v290 = vmax.f32 %v288, %v234
    %v291 = vmax.f32 %v289, %v239
    %v292 = vmax.f32 %v290, %v244
    %v293 = vmax.f32 %v291, %v249
    %v294 = vmax.f32 %v292, %v254
    %v295 = vmax.f32 %v293, %v259
    %v296 = vmax.f32 %v294, %v264
    %v297 = vmax.f32 %v295, %v269
    %v298 = vmax.f32 %v296, %v274
    %v299 = vmax.f32 %v297, %v279
    %v300 = vmax.f32 %v298, %v284
    %301 = vst [vmem:[#allocation5] sm:$0xff] %v299
    %302 = vst [vmem:[#allocation5 + $0x8] sm:$0xff] %v300
    // Predicated region
    $region14: #{tpu_custom_call.1} parent=1 // pred_check
      _
    $region15: #{tpu_custom_call.1} parent=1 // pred_check_branch
      %304 = sbr.rel (0) target = $region17
    $region16: #{tpu_custom_call.1} parent=1 // pred_region
      %s306 = ssub.s32 256, 256
      %307 = vsyncadd [#allocation4], %s306
      %s308 = sshll.u32 [#allocation5], 4
      %s309 = int_to_ptr.vmem [resolvable:$true] %s308
      %314 = dma.vmem_to_hbm [thread:$0]  %s309, 256, %s2, [#allocation4], 128, 128, 8
    $region17: #{tpu_custom_call.1} parent=1 // pred_fallthru
      _
    // Predicated region
    $region18: #{tpu_custom_call.1} parent=1 // pred_check
      _
    $region19: #{tpu_custom_call.1} parent=1 // pred_check_branch
      %316 = sbr.rel (0) target = $region21
    $region20: #{tpu_custom_call.1} parent=1 // pred_region
      %317 = dma.done [#allocation4], 256
    $region21: #{tpu_custom_call.1} parent=1 // pred_fallthru
      _
    %318 = vsyncpa [#allocation3], 1
    %319 = vsyncpa [#allocation4], 1

</llo_original>
